<compile_context>
chip_gen: v7x
topology: tpu7x:2x2x1
jax: 0.10.0
libtpu: 0.0.40
codegen_flags: <defaults>
</compile_context>

<pallas_src>
import jax
import jax.numpy as jnp
from jax.experimental import pallas as pl
from jax.experimental.pallas import tpu as pltpu

NUM_MODELS = 3
NUM_IN_CH = 4
ROW_CAP = 512  # sublane rows per tile: 4*512*128*4B = 1 MiB in, 4*(512*128*4B) = 1 MiB out


def ensemble_kernel(x_ref, p_ref, res_ref, p0_ref, p1_ref, p2_ref):
    """x_ref: (1, 4, R, 128) VMEM f32; p_ref: (26,) f32 SMEM; outputs: (1, R, 128)."""
    # Channel slabs straight from the ref — each a dense (R, 128) f32 slab.
    x0 = x_ref[0, 0]
    x1 = x_ref[0, 1]
    x2 = x_ref[0, 2]
    x3 = x_ref[0, 3]

    # ---- model 0: 4-in, 4-class 1x1 conv head — unrolled VPU FMAs (no MXU) ----
    # w0[k, c] packed at 4*k + c ; b0[c] at 16 + c.
    l0 = p_ref[0] * x0 + p_ref[4] * x1 + p_ref[8] * x2 + p_ref[12] * x3 + p_ref[16]
    l1 = p_ref[1] * x0 + p_ref[5] * x1 + p_ref[9] * x2 + p_ref[13] * x3 + p_ref[17]
    l2 = p_ref[2] * x0 + p_ref[6] * x1 + p_ref[10] * x2 + p_ref[14] * x3 + p_ref[18]
    l3 = p_ref[3] * x0 + p_ref[7] * x1 + p_ref[11] * x2 + p_ref[15] * x3 + p_ref[19]
    m = jnp.maximum(jnp.maximum(l0, l1), jnp.maximum(l2, l3))
    e0 = jnp.exp(l0 - m)
    e1 = jnp.exp(l1 - m)
    e2 = jnp.exp(l2 - m)
    e3 = jnp.exp(l3 - m)
    # Exact divide (not approx reciprocal) — required for tolerance parity.
    pred0 = (e1 + e2) / ((e0 + e1) + (e2 + e3))          # num_classes == 4 branch

    # ---- model 1: 1-in (last channel), 2-class head; softmax[1] == sigmoid(l1-l0) ----
    # dw = w1[0,1]-w1[0,0] at p[20], db = b1[0,1]-b1[0,0] at p[21] (pre-folded).
    z1 = x3 * p_ref[20] + p_ref[21]
    pred1 = 0.5 * jnp.tanh(0.5 * z1) + 0.5               # num_classes > 1, != 4 branch

    # ---- model 2: 3-in (first 3 channels), 1-class head -> sigmoid ----
    z2 = x0 * p_ref[22] + x1 * p_ref[23] + x2 * p_ref[24] + p_ref[25]
    pred2 = 0.5 * jnp.tanh(0.5 * z2) + 0.5               # single-channel branch

    # weights is None -> per-model weight 1.0, divide by len(models)
    result = (pred0 + pred1 + pred2) * (1.0 / NUM_MODELS)

    res_ref[0] = result.astype(res_ref.dtype)
    p0_ref[0] = pred0.astype(p0_ref.dtype)
    p1_ref[0] = pred1.astype(p1_ref.dtype)
    p2_ref[0] = pred2.astype(p2_ref.dtype)


def _pack_params(params):
    """Pack the six tiny weight/bias arrays into one (26,) f32 SMEM vector."""
    w0, b0, w1, b1, w2, b2 = params
    dw1 = w1[0, 1] - w1[0, 0]
    db1 = b1[0, 1] - b1[0, 0]
    return jnp.concatenate([
        w0.reshape(-1),            # 0..15 : w0[k, c] at 4*k + c
        b0.reshape(-1),            # 16..19
        jnp.stack([dw1, db1]),     # 20, 21 : folded 2-class head
        w2.reshape(-1),            # 22..24
        b2.reshape(-1),            # 25
    ]).astype(jnp.float32)


def ensemble_forward(x_nchw, params, out_dtype=jnp.float32):
    """x_nchw: (N, 4, H, W) float32. Returns {'result', 'model_preds'} in NCHW."""
    N, C, H, W = x_nchw.shape
    assert C == NUM_IN_CH
    HW = H * W
    assert HW % 128 == 0, "H*W must be a multiple of 128"
    rows = HW // 128

    # Full-extent block for small images (always legal), else fixed ROW_CAP
    # (multiple of 8) with a cdiv grid — Pallas masks the partial last tile.
    R = rows if rows <= ROW_CAP else ROW_CAP
    num_tiles = pl.cdiv(rows, R)

    # NCHW is already channel-second / spatial-contiguous: pure reshape, no transpose.
    x4d = x_nchw.reshape(N, C, rows, 128)
    p_packed = _pack_params(params)

    out_struct = jax.ShapeDtypeStruct((N, rows, 128), out_dtype)
    out_spec = pl.BlockSpec((1, R, 128), lambda t, n: (n, t, 0))

    res, y0, y1, y2 = pl.pallas_call(
        ensemble_kernel,
        out_shape=(out_struct, out_struct, out_struct, out_struct),
        grid_spec=pltpu.PrefetchScalarGridSpec(
            num_scalar_prefetch=0,
            grid=(num_tiles, N),    # tile axis outermost: even megacore split on v7x
            in_specs=[
                pl.BlockSpec((1, C, R, 128), lambda t, n: (n, 0, t, 0)),   # x block
                pl.BlockSpec(memory_space=pltpu.MemorySpace.SMEM),          # packed params
            ],
            out_specs=(out_spec, out_spec, out_spec, out_spec),
        ),
        compiler_params=pltpu.CompilerParams(
            dimension_semantics=("parallel", "parallel")),
    )(x4d, p_packed)

    def to_nchw(v):                                    # contiguous reshape, no transpose
        return v.reshape(N, 1, H, W)

    return {"result": to_nchw(res),
            "model_preds": [to_nchw(y0), to_nchw(y1), to_nchw(y2)]}


def _reference(x_nchw, params):
    """Plain-JAX replica of the PyTorch EnsembleModel forward for the 3 synthetic heads."""
    w0, b0, w1, b1, w2, b2 = params
    N, C, H, W = x_nchw.shape
    x_pm = jnp.transpose(x_nchw, (0, 2, 3, 1)).reshape(-1, C)

    l0 = x_pm @ w0 + b0
    p0 = jax.nn.softmax(l0, axis=-1)
    y0 = p0[:, 1:2] + p0[:, 2:3]

    l1 = x_pm[:, 3:4] * w1 + b1
    p1 = jax.nn.softmax(l1, axis=-1)
    y1 = p1[:, 1:2]

    l2 = jnp.sum(x_pm[:, 0:3] * w2, axis=-1, keepdims=True) + b2
    y2 = jax.nn.sigmoid(l2)

    res = (y0 + y1 + y2) / NUM_MODELS

    def to_nchw(v):
        return v.reshape(N, H, W, 1).transpose(0, 3, 1, 2)

    return {"result": to_nchw(res), "model_preds": [to_nchw(y0), to_nchw(y1), to_nchw(y2)]}


def init_params(key):
    k0, k1, k2, k3, k4, k5 = jax.random.split(key, 6)
    w0 = jax.random.normal(k0, (4, 4), jnp.float32) * 0.5   # (in=4, out=4)
    b0 = jax.random.normal(k1, (1, 4), jnp.float32) * 0.1
    w1 = jax.random.normal(k2, (1, 2), jnp.float32) * 0.5   # 1-in, 2-class
    b1 = jax.random.normal(k3, (1, 2), jnp.float32) * 0.1
    w2 = jax.random.normal(k4, (1, 3), jnp.float32) * 0.5   # 3-in, 1-class
    b2 = jax.random.normal(k5, (1, 1), jnp.float32) * 0.1
    return (w0, b0, w1, b1, w2, b2)


if __name__ == "__main__":
    key = jax.random.PRNGKey(0)
    kx, kp = jax.random.split(key)
    # small shapes: batch=2, channels=4, spatial=16x16; target_size == (16,16)
    x = jax.random.normal(kx, (2, 4, 16, 16), jnp.float32)
    params = init_params(kp)

    out = ensemble_forward(x, params)
    jax.block_until_ready(out["result"])

    ref = _reference(x, params)
    assert out["result"].shape == (2, 1, 16, 16)
    assert len(out["model_preds"]) == NUM_MODELS
    assert jnp.allclose(out["result"], ref["result"], atol=1e-3)
    for a, b in zip(out["model_preds"], ref["model_preds"]):
        assert a.shape == (2, 1, 16, 16)
        assert jnp.allclose(a, b, atol=1e-3)

    print("KERNEL_OK")
</pallas_src>

<mosaic_0001>
module attributes {stable_mosaic.version = 11 : i64} {
  func.func @ensemble_kernel(%arg0: i32, %arg1: i32, %arg2: memref<1x4x2x128xf32, #tpu.memory_space<vmem>>, %arg3: memref<26xf32, #tpu.memory_space<smem>>, %arg4: memref<1x2x128xf32, #tpu.memory_space<vmem>>, %arg5: memref<1x2x128xf32, #tpu.memory_space<vmem>>, %arg6: memref<1x2x128xf32, #tpu.memory_space<vmem>>, %arg7: memref<1x2x128xf32, #tpu.memory_space<vmem>>) attributes {dimension_semantics = [#tpu.dimension_semantics<parallel>, #tpu.dimension_semantics<parallel>], iteration_bounds = array<i64: 1, 2>, scalar_prefetch = 0 : i64, scratch_operands = 0 : i64, tpu.core_type = #tpu.core_type<tc>, window_params = [{transform_indices = @transform_0, window_bounds = array<i64: 1, 4, 2, 128>}, {transform_indices = @transform_1, window_bounds = array<i64: 26>}, {transform_indices = @transform_2, window_bounds = array<i64: 1, 2, 128>}, {transform_indices = @transform_3, window_bounds = array<i64: 1, 2, 128>}, {transform_indices = @transform_4, window_bounds = array<i64: 1, 2, 128>}, {transform_indices = @transform_5, window_bounds = array<i64: 1, 2, 128>}]} {
    %c0 = arith.constant 0 : index
    %c0_0 = arith.constant 0 : index
    %c0_1 = arith.constant 0 : index
    %c0_2 = arith.constant 0 : index
    %0 = vector.load %arg2[%c0, %c0_0, %c0_1, %c0_2] : memref<1x4x2x128xf32, #tpu.memory_space<vmem>>, vector<1x1x2x128xf32>
    %1 = vector.shape_cast %0 : vector<1x1x2x128xf32> to vector<2x128xf32>
    %c0_3 = arith.constant 0 : index
    %c1 = arith.constant 1 : index
    %c0_4 = arith.constant 0 : index
    %c0_5 = arith.constant 0 : index
    %2 = vector.load %arg2[%c0_3, %c1, %c0_4, %c0_5] : memref<1x4x2x128xf32, #tpu.memory_space<vmem>>, vector<1x1x2x128xf32>
    %3 = vector.shape_cast %2 : vector<1x1x2x128xf32> to vector<2x128xf32>
    %c0_6 = arith.constant 0 : index
    %c2 = arith.constant 2 : index
    %c0_7 = arith.constant 0 : index
    %c0_8 = arith.constant 0 : index
    %4 = vector.load %arg2[%c0_6, %c2, %c0_7, %c0_8] : memref<1x4x2x128xf32, #tpu.memory_space<vmem>>, vector<1x1x2x128xf32>
    %5 = vector.shape_cast %4 : vector<1x1x2x128xf32> to vector<2x128xf32>
    %c0_9 = arith.constant 0 : index
    %c3 = arith.constant 3 : index
    %c0_10 = arith.constant 0 : index
    %c0_11 = arith.constant 0 : index
    %6 = vector.load %arg2[%c0_9, %c3, %c0_10, %c0_11] : memref<1x4x2x128xf32, #tpu.memory_space<vmem>>, vector<1x1x2x128xf32>
    %7 = vector.shape_cast %6 : vector<1x1x2x128xf32> to vector<2x128xf32>
    %c0_12 = arith.constant 0 : index
    %8 = memref.load %arg3[%c0_12] : memref<26xf32, #tpu.memory_space<smem>>
    %9 = vector.broadcast %8 : f32 to vector<2x128xf32>
    %10 = arith.mulf %9, %1 : vector<2x128xf32>
    %c4 = arith.constant 4 : index
    %11 = memref.load %arg3[%c4] : memref<26xf32, #tpu.memory_space<smem>>
    %12 = vector.broadcast %11 : f32 to vector<2x128xf32>
    %13 = arith.mulf %12, %3 : vector<2x128xf32>
    %14 = arith.addf %10, %13 : vector<2x128xf32>
    %c8 = arith.constant 8 : index
    %15 = memref.load %arg3[%c8] : memref<26xf32, #tpu.memory_space<smem>>
    %16 = vector.broadcast %15 : f32 to vector<2x128xf32>
    %17 = arith.mulf %16, %5 : vector<2x128xf32>
    %18 = arith.addf %14, %17 : vector<2x128xf32>
    %c12 = arith.constant 12 : index
    %19 = memref.load %arg3[%c12] : memref<26xf32, #tpu.memory_space<smem>>
    %20 = vector.broadcast %19 : f32 to vector<2x128xf32>
    %21 = arith.mulf %20, %7 : vector<2x128xf32>
    %22 = arith.addf %18, %21 : vector<2x128xf32>
    %c16 = arith.constant 16 : index
    %23 = memref.load %arg3[%c16] : memref<26xf32, #tpu.memory_space<smem>>
    %24 = vector.broadcast %23 : f32 to vector<2x128xf32>
    %25 = arith.addf %22, %24 : vector<2x128xf32>
    %c1_13 = arith.constant 1 : index
    %26 = memref.load %arg3[%c1_13] : memref<26xf32, #tpu.memory_space<smem>>
    %27 = vector.broadcast %26 : f32 to vector<2x128xf32>
    %28 = arith.mulf %27, %1 : vector<2x128xf32>
    %c5 = arith.constant 5 : index
    %29 = memref.load %arg3[%c5] : memref<26xf32, #tpu.memory_space<smem>>
    %30 = vector.broadcast %29 : f32 to vector<2x128xf32>
    %31 = arith.mulf %30, %3 : vector<2x128xf32>
    %32 = arith.addf %28, %31 : vector<2x128xf32>
    %c9 = arith.constant 9 : index
    %33 = memref.load %arg3[%c9] : memref<26xf32, #tpu.memory_space<smem>>
    %34 = vector.broadcast %33 : f32 to vector<2x128xf32>
    %35 = arith.mulf %34, %5 : vector<2x128xf32>
    %36 = arith.addf %32, %35 : vector<2x128xf32>
    %c13 = arith.constant 13 : index
    %37 = memref.load %arg3[%c13] : memref<26xf32, #tpu.memory_space<smem>>
    %38 = vector.broadcast %37 : f32 to vector<2x128xf32>
    %39 = arith.mulf %38, %7 : vector<2x128xf32>
    %40 = arith.addf %36, %39 : vector<2x128xf32>
    %c17 = arith.constant 17 : index
    %41 = memref.load %arg3[%c17] : memref<26xf32, #tpu.memory_space<smem>>
    %42 = vector.broadcast %41 : f32 to vector<2x128xf32>
    %43 = arith.addf %40, %42 : vector<2x128xf32>
    %c2_14 = arith.constant 2 : index
    %44 = memref.load %arg3[%c2_14] : memref<26xf32, #tpu.memory_space<smem>>
    %45 = vector.broadcast %44 : f32 to vector<2x128xf32>
    %46 = arith.mulf %45, %1 : vector<2x128xf32>
    %c6 = arith.constant 6 : index
    %47 = memref.load %arg3[%c6] : memref<26xf32, #tpu.memory_space<smem>>
    %48 = vector.broadcast %47 : f32 to vector<2x128xf32>
    %49 = arith.mulf %48, %3 : vector<2x128xf32>
    %50 = arith.addf %46, %49 : vector<2x128xf32>
    %c10 = arith.constant 10 : index
    %51 = memref.load %arg3[%c10] : memref<26xf32, #tpu.memory_space<smem>>
    %52 = vector.broadcast %51 : f32 to vector<2x128xf32>
    %53 = arith.mulf %52, %5 : vector<2x128xf32>
    %54 = arith.addf %50, %53 : vector<2x128xf32>
    %c14 = arith.constant 14 : index
    %55 = memref.load %arg3[%c14] : memref<26xf32, #tpu.memory_space<smem>>
    %56 = vector.broadcast %55 : f32 to vector<2x128xf32>
    %57 = arith.mulf %56, %7 : vector<2x128xf32>
    %58 = arith.addf %54, %57 : vector<2x128xf32>
    %c18 = arith.constant 18 : index
    %59 = memref.load %arg3[%c18] : memref<26xf32, #tpu.memory_space<smem>>
    %60 = vector.broadcast %59 : f32 to vector<2x128xf32>
    %61 = arith.addf %58, %60 : vector<2x128xf32>
    %c3_15 = arith.constant 3 : index
    %62 = memref.load %arg3[%c3_15] : memref<26xf32, #tpu.memory_space<smem>>
    %63 = vector.broadcast %62 : f32 to vector<2x128xf32>
    %64 = arith.mulf %63, %1 : vector<2x128xf32>
    %c7 = arith.constant 7 : index
    %65 = memref.load %arg3[%c7] : memref<26xf32, #tpu.memory_space<smem>>
    %66 = vector.broadcast %65 : f32 to vector<2x128xf32>
    %67 = arith.mulf %66, %3 : vector<2x128xf32>
    %68 = arith.addf %64, %67 : vector<2x128xf32>
    %c11 = arith.constant 11 : index
    %69 = memref.load %arg3[%c11] : memref<26xf32, #tpu.memory_space<smem>>
    %70 = vector.broadcast %69 : f32 to vector<2x128xf32>
    %71 = arith.mulf %70, %5 : vector<2x128xf32>
    %72 = arith.addf %68, %71 : vector<2x128xf32>
    %c15 = arith.constant 15 : index
    %73 = memref.load %arg3[%c15] : memref<26xf32, #tpu.memory_space<smem>>
    %74 = vector.broadcast %73 : f32 to vector<2x128xf32>
    %75 = arith.mulf %74, %7 : vector<2x128xf32>
    %76 = arith.addf %72, %75 : vector<2x128xf32>
    %c19 = arith.constant 19 : index
    %77 = memref.load %arg3[%c19] : memref<26xf32, #tpu.memory_space<smem>>
    %78 = vector.broadcast %77 : f32 to vector<2x128xf32>
    %79 = arith.addf %76, %78 : vector<2x128xf32>
    %80 = arith.maximumf %25, %43 : vector<2x128xf32>
    %81 = arith.maximumf %61, %79 : vector<2x128xf32>
    %82 = arith.maximumf %80, %81 : vector<2x128xf32>
    %83 = arith.subf %25, %82 : vector<2x128xf32>
    %84 = math.exp %83 : vector<2x128xf32>
    %85 = arith.subf %43, %82 : vector<2x128xf32>
    %86 = math.exp %85 : vector<2x128xf32>
    %87 = arith.subf %61, %82 : vector<2x128xf32>
    %88 = math.exp %87 : vector<2x128xf32>
    %89 = arith.subf %79, %82 : vector<2x128xf32>
    %90 = math.exp %89 : vector<2x128xf32>
    %91 = arith.addf %86, %88 : vector<2x128xf32>
    %92 = arith.addf %84, %86 : vector<2x128xf32>
    %93 = arith.addf %88, %90 : vector<2x128xf32>
    %94 = arith.addf %92, %93 : vector<2x128xf32>
    %95 = arith.divf %91, %94 : vector<2x128xf32>
    %c20 = arith.constant 20 : index
    %96 = memref.load %arg3[%c20] : memref<26xf32, #tpu.memory_space<smem>>
    %97 = vector.broadcast %96 : f32 to vector<2x128xf32>
    %98 = arith.mulf %7, %97 : vector<2x128xf32>
    %c21 = arith.constant 21 : index
    %99 = memref.load %arg3[%c21] : memref<26xf32, #tpu.memory_space<smem>>
    %100 = vector.broadcast %99 : f32 to vector<2x128xf32>
    %101 = arith.addf %98, %100 : vector<2x128xf32>
    %cst = arith.constant 5.000000e-01 : f32
    %102 = vector.broadcast %cst : f32 to vector<2x128xf32>
    %103 = arith.mulf %102, %101 : vector<2x128xf32>
    %104 = math.tanh %103 : vector<2x128xf32>
    %cst_16 = arith.constant 5.000000e-01 : f32
    %105 = vector.broadcast %cst_16 : f32 to vector<2x128xf32>
    %106 = arith.mulf %105, %104 : vector<2x128xf32>
    %cst_17 = arith.constant 5.000000e-01 : f32
    %107 = vector.broadcast %cst_17 : f32 to vector<2x128xf32>
    %108 = arith.addf %106, %107 : vector<2x128xf32>
    %c22 = arith.constant 22 : index
    %109 = memref.load %arg3[%c22] : memref<26xf32, #tpu.memory_space<smem>>
    %110 = vector.broadcast %109 : f32 to vector<2x128xf32>
    %111 = arith.mulf %1, %110 : vector<2x128xf32>
    %c23 = arith.constant 23 : index
    %112 = memref.load %arg3[%c23] : memref<26xf32, #tpu.memory_space<smem>>
    %113 = vector.broadcast %112 : f32 to vector<2x128xf32>
    %114 = arith.mulf %3, %113 : vector<2x128xf32>
    %115 = arith.addf %111, %114 : vector<2x128xf32>
    %c24 = arith.constant 24 : index
    %116 = memref.load %arg3[%c24] : memref<26xf32, #tpu.memory_space<smem>>
    %117 = vector.broadcast %116 : f32 to vector<2x128xf32>
    %118 = arith.mulf %5, %117 : vector<2x128xf32>
    %119 = arith.addf %115, %118 : vector<2x128xf32>
    %c25 = arith.constant 25 : index
    %120 = memref.load %arg3[%c25] : memref<26xf32, #tpu.memory_space<smem>>
    %121 = vector.broadcast %120 : f32 to vector<2x128xf32>
    %122 = arith.addf %119, %121 : vector<2x128xf32>
    %cst_18 = arith.constant 5.000000e-01 : f32
    %123 = vector.broadcast %cst_18 : f32 to vector<2x128xf32>
    %124 = arith.mulf %123, %122 : vector<2x128xf32>
    %125 = math.tanh %124 : vector<2x128xf32>
    %cst_19 = arith.constant 5.000000e-01 : f32
    %126 = vector.broadcast %cst_19 : f32 to vector<2x128xf32>
    %127 = arith.mulf %126, %125 : vector<2x128xf32>
    %cst_20 = arith.constant 5.000000e-01 : f32
    %128 = vector.broadcast %cst_20 : f32 to vector<2x128xf32>
    %129 = arith.addf %127, %128 : vector<2x128xf32>
    %130 = arith.addf %95, %108 : vector<2x128xf32>
    %131 = arith.addf %130, %129 : vector<2x128xf32>
    %cst_21 = arith.constant 0.333333343 : f32
    %132 = vector.broadcast %cst_21 : f32 to vector<2x128xf32>
    %133 = arith.mulf %131, %132 : vector<2x128xf32>
    %c0_22 = arith.constant 0 : index
    %c0_23 = arith.constant 0 : index
    %c0_24 = arith.constant 0 : index
    %134 = vector.load %arg4[%c0_22, %c0_23, %c0_24] : memref<1x2x128xf32, #tpu.memory_space<vmem>>, vector<1x2x128xf32>
    %135 = vector.shape_cast %134 : vector<1x2x128xf32> to vector<2x128xf32>
    %136 = vector.shape_cast %133 : vector<2x128xf32> to vector<1x2x128xf32>
    tpu.vector_store %arg4[%c0_22, %c0_23, %c0_24], %136 {strides = array<i32>} : memref<1x2x128xf32, #tpu.memory_space<vmem>>, vector<1x2x128xf32>,
    %c0_25 = arith.constant 0 : index
    %c0_26 = arith.constant 0 : index
    %c0_27 = arith.constant 0 : index
    %137 = vector.load %arg5[%c0_25, %c0_26, %c0_27] : memref<1x2x128xf32, #tpu.memory_space<vmem>>, vector<1x2x128xf32>
    %138 = vector.shape_cast %137 : vector<1x2x128xf32> to vector<2x128xf32>
    %139 = vector.shape_cast %95 : vector<2x128xf32> to vector<1x2x128xf32>
    tpu.vector_store %arg5[%c0_25, %c0_26, %c0_27], %139 {strides = array<i32>} : memref<1x2x128xf32, #tpu.memory_space<vmem>>, vector<1x2x128xf32>,
    %c0_28 = arith.constant 0 : index
    %c0_29 = arith.constant 0 : index
    %c0_30 = arith.constant 0 : index
    %140 = vector.load %arg6[%c0_28, %c0_29, %c0_30] : memref<1x2x128xf32, #tpu.memory_space<vmem>>, vector<1x2x128xf32>
    %141 = vector.shape_cast %140 : vector<1x2x128xf32> to vector<2x128xf32>
    %142 = vector.shape_cast %108 : vector<2x128xf32> to vector<1x2x128xf32>
    tpu.vector_store %arg6[%c0_28, %c0_29, %c0_30], %142 {strides = array<i32>} : memref<1x2x128xf32, #tpu.memory_space<vmem>>, vector<1x2x128xf32>,
    %c0_31 = arith.constant 0 : index
    %c0_32 = arith.constant 0 : index
    %c0_33 = arith.constant 0 : index
    %143 = vector.load %arg7[%c0_31, %c0_32, %c0_33] : memref<1x2x128xf32, #tpu.memory_space<vmem>>, vector<1x2x128xf32>
    %144 = vector.shape_cast %143 : vector<1x2x128xf32> to vector<2x128xf32>
    %145 = vector.shape_cast %129 : vector<2x128xf32> to vector<1x2x128xf32>
    tpu.vector_store %arg7[%c0_31, %c0_32, %c0_33], %145 {strides = array<i32>} : memref<1x2x128xf32, #tpu.memory_space<vmem>>, vector<1x2x128xf32>,
    return
  }
  func.func @transform_0(%arg0: i32, %arg1: i32) -> (i32, i32, i32, i32) {
    %c0_i32 = arith.constant 0 : i32
    %c0_i32_0 = arith.constant 0 : i32
    %c0_i32_1 = arith.constant 0 : i32
    return %arg1, %c0_i32, %arg0, %c0_i32_0 : i32, i32, i32, i32
  }
  func.func @transform_1(%arg0: i32, %arg1: i32) -> i32 {
    %c0_i32 = arith.constant 0 : i32
    %c0_i32_0 = arith.constant 0 : i32
    return %c0_i32 : i32
  }
  func.func @transform_2(%arg0: i32, %arg1: i32) -> (i32, i32, i32) {
    %c0_i32 = arith.constant 0 : i32
    %c0_i32_0 = arith.constant 0 : i32
    return %arg1, %arg0, %c0_i32 : i32, i32, i32
  }
  func.func @transform_3(%arg0: i32, %arg1: i32) -> (i32, i32, i32) {
    %c0_i32 = arith.constant 0 : i32
    %c0_i32_0 = arith.constant 0 : i32
    return %arg1, %arg0, %c0_i32 : i32, i32, i32
  }
  func.func @transform_4(%arg0: i32, %arg1: i32) -> (i32, i32, i32) {
    %c0_i32 = arith.constant 0 : i32
    %c0_i32_0 = arith.constant 0 : i32
    return %arg1, %arg0, %c0_i32 : i32, i32, i32
  }
  func.func @transform_5(%arg0: i32, %arg1: i32) -> (i32, i32, i32) {
    %c0_i32 = arith.constant 0 : i32
    %c0_i32_0 = arith.constant 0 : i32
    return %arg1, %arg0, %c0_i32 : i32, i32, i32
  }
}

</mosaic_0001>

<llo_original>
// kernel: tpu_custom_call.1
$region0: #{tpu_custom_call.1}
  #allocation0 [shape = 'u32[]', space=smem, size = 0x4, offset = 0x4, fixed_abs, tag = 'smem constant byte address 0x4 - core index']
  #allocation1 [shape = 'u32[144,128]{1,0:T(1,128)}', space=vmem, size = 0x12000, scoped, tag = 'internal scratch']
  %s0 = inlined_call_operand.hbm [shape: f32[2,4,2,128], index: 0, kind: input, shape index: {}]
  %s1 = inlined_call_operand.vmem [shape: f32[26], index: 1, kind: input, shape index: {}]
  %s2 = inlined_call_operand.hbm [shape: f32[2,2,128], index: 2, kind: output, shape index: {0}]
  %s3 = inlined_call_operand.hbm [shape: f32[2,2,128], index: 3, kind: output, shape index: {1}]
  %s4 = inlined_call_operand.hbm [shape: f32[2,2,128], index: 4, kind: output, shape index: {2}]
  %s5 = inlined_call_operand.hbm [shape: f32[2,2,128], index: 5, kind: output, shape index: {3}]
  %6 = xla_tuple %s2, %s3, %s4, %s5
  %s7 = sld [smem:[#allocation0]]
  $region73: #{tpu_custom_call.1} parent=0
    _
  %s9 = ssub.s32 1, %s7
  %s10 = scalar_select 0, %s9, %s7
  $region1: #{tpu_custom_call.1} parent=0
    #allocation2 [shape = 'u8[8192]{0}', space=vmem, size = 0x2000, scoped, tag = 'input window, operand 0']
    #allocation3 [shape = 's32[2]{0}', space=sflag, size = 0x8, scoped, tag = 'scoped memory for tpu_custom_call.1']
    #allocation4 [shape = 's32[2]{0}', space=sflag, size = 0x8, scoped, tag = 'scoped memory for tpu_custom_call.1']
    #allocation5 [shape = 's32[2]{0}', space=sflag, size = 0x8, scoped, tag = 'scoped memory for tpu_custom_call.1']
    #allocation6 [shape = 'u8[512]{0}', space=smem, size = 0x200, scoped, tag = 'input window, operand 1, single buffered']
    #allocation7 [shape = 'u8[2048]{0}', space=vmem, size = 0x800, scoped, tag = 'output window, operand 0']
    #allocation8 [shape = 'u8[2048]{0}', space=vmem, size = 0x800, scoped, tag = 'output window, operand 1']
    #allocation9 [shape = 's32[2]{0}', space=sflag, size = 0x8, scoped, tag = 'scoped memory for tpu_custom_call.1']
    #allocation10 [shape = 'u8[2048]{0}', space=vmem, size = 0x800, scoped, tag = 'output window, operand 2']
    #allocation11 [shape = 'u8[2048]{0}', space=vmem, size = 0x800, scoped, tag = 'output window, operand 3']
    #allocation12 [shape = 's32[2]{0}', space=sflag, size = 0x8, scoped, tag = 'scoped memory for tpu_custom_call.1']
    %11 = vsyncpa [#allocation3], 0
    %s12 = scalar_lea.sflag [#allocation3], 1
    %13 = vsyncpa %s12, 0
    %14 = vsyncpa [#allocation5], 0
    %15 = vsyncpa [#allocation4], 0
    %s16 = scalar_lea.sflag [#allocation4], 1
    %17 = vsyncpa %s16, 0
    %18 = vsyncpa [#allocation9], 0
    %s19 = scalar_lea.sflag [#allocation9], 1
    %20 = vsyncpa %s19, 0
    %21 = vsyncpa [#allocation12], 0
    %s22 = scalar_lea.sflag [#allocation12], 1
    %23 = vsyncpa %s22, 0
    loop: start=0, step=1, limit=4
    $region2: #{tpu_custom_call.1} parent=1 // loop_pre_header
      _
    $region3: #{tpu_custom_call.1} parent=1 // loop_header
      %s25 = sphi 0, %s29
      %p26 = scmp.ge.s32.totalorder %s25, 4
      %s32 = sphi 0, %s44
      %s33 = sphi 0, %s40
      %s34 = sphi 0, %s32
      %s35 = sphi 0, %s33
      %s36 = sphi 0, %s34
      %s37 = sphi 0, %s35
      %s49 = sphi 0, %s51
      %s52 = sphi 0, %s49
      %s53 = sphi 0, %s52
      %s69 = sphi 0, %s53
      %s73 = sphi 0, %s73
      %s75 = sphi 0, %s73
      %s76 = sphi 0, %s75
      %s90 = sphi 0, %s76
      %s98 = sphi 0, %s100
      %s101 = sphi 0, %s98
      %s102 = sphi 0, %s101
      %s118 = sphi 0, %s102
      %s126 = sphi 0, %s128
      %s129 = sphi 0, %s126
      %s130 = sphi 0, %s129
      %s146 = sphi 0, %s130
      %s154 = sphi 0, %s156
      %s157 = sphi 0, %s154
      %s158 = sphi 0, %s157
      %s174 = sphi 0, %s158
      %s182 = sphi 0, %s184
      %s185 = sphi 0, %s182
      %s186 = sphi 0, %s185
      %s202 = sphi 0, %s186
    $region4: #{tpu_custom_call.1} parent=1 // loop_header_branch
      %28 = sbr.rel (%p26) target = $region8
    $region5: #{tpu_custom_call.1} parent=1 // loop_body
      %s30 = ssub.s32 %s25, 1
      %s31 = ssub.s32 %s25, 2
      %s38 = sadd.s32 1, %s33
      %p39 = scmp.ge.s32.totalorder %s38, 2
      %s40 = scalar_select %p39, 0, %s38
      %s41 = sadd.s32 1, %s32
      %s42 = scalar_select %p39, %s41, %s32
      %p43 = scmp.ge.s32.totalorder %s42, 1
      %s44 = scalar_select %p43, 0, %s42
      %s45 = ssub.s32 %s33, %s40
      %s46 = ssub.s32 %s32, %s44
      %s47 = sor.u32 %s45, %s46
      %p48 = scmp.eq.s32.totalorder %s47, 0
      %s50 = sadd.s32 %s49, 1
      %s51 = scalar_select %p48, %s49, %s50
      %p54 = pneg %p48
      %p55 = scmp.eq.s32.totalorder %s25, 1
      %p56 = por %p54, %p55
      %p57 = scmp.ne.s32.totalorder %s49, %s52
      %p58 = scmp.eq.s32.totalorder %s25, 0
      %p59 = por %p57, %p58
      %p60 = scmp.ne.s32.totalorder %s49, %s52
      %p61 = scmp.eq.s32.totalorder %s30, 1
      %p62 = por %p60, %p61
      %p63 = scmp.ne.s32.totalorder %s52, %s53
      %p64 = scmp.eq.s32.totalorder %s30, 0
      %p65 = por %p63, %p64
      %p66 = scmp.ne.s32.totalorder %s52, %s53
      %p67 = scmp.eq.s32.totalorder %s31, 1
      %p68 = por %p66, %p67
      %p70 = scmp.ne.s32.totalorder %s53, %s69
      %p71 = scmp.eq.s32.totalorder %s31, 0
      %p72 = por %p70, %p71
      %s74 = sadd.s32 %s73, 1
      %p77 = scmp.eq.s32.totalorder %s25, 1
      %p78 = scmp.ne.s32.totalorder %s73, %s75
      %p79 = scmp.eq.s32.totalorder %s25, 0
      %p80 = por %p78, %p79
      %p81 = scmp.ne.s32.totalorder %s73, %s75
      %p82 = scmp.eq.s32.totalorder %s30, 1
      %p83 = por %p81, %p82
      %p84 = scmp.ne.s32.totalorder %s75, %s76
      %p85 = scmp.eq.s32.totalorder %s30, 0
      %p86 = por %p84, %p85
      %p87 = scmp.ne.s32.totalorder %s75, %s76
      %p88 = scmp.eq.s32.totalorder %s31, 1
      %p89 = por %p87, %p88
      %p91 = scmp.ne.s32.totalorder %s76, %s90
      %p92 = scmp.eq.s32.totalorder %s31, 0
      %p93 = por %p91, %p92
      %s94 = ssub.s32 %s33, %s40
      %s95 = ssub.s32 %s32, %s44
      %s96 = sor.u32 %s94, %s95
      %p97 = scmp.eq.s32.totalorder %s96, 0
      %s99 = sadd.s32 %s98, 1
      %s100 = scalar_select %p97, %s98, %s99
      %p103 = pneg %p97
      %p104 = scmp.eq.s32.totalorder %s25, 1
      %p105 = por %p103, %p104
      %p106 = scmp.ne.s32.totalorder %s98, %s101
      %p107 = scmp.eq.s32.totalorder %s25, 0
      %p108 = por %p106, %p107
      %p109 = scmp.ne.s32.totalorder %s98, %s101
      %p110 = scmp.eq.s32.totalorder %s30, 1
      %p111 = por %p109, %p110
      %p112 = scmp.ne.s32.totalorder %s101, %s102
      %p113 = scmp.eq.s32.totalorder %s30, 0
      %p114 = por %p112, %p113
      %p115 = scmp.ne.s32.totalorder %s101, %s102
      %p116 = scmp.eq.s32.totalorder %s31, 1
      %p117 = por %p115, %p116
      %p119 = scmp.ne.s32.totalorder %s102, %s118
      %p120 = scmp.eq.s32.totalorder %s31, 0
      %p121 = por %p119, %p120
      %s122 = ssub.s32 %s33, %s40
      %s123 = ssub.s32 %s32, %s44
      %s124 = sor.u32 %s122, %s123
      %p125 = scmp.eq.s32.totalorder %s124, 0
      %s127 = sadd.s32 %s126, 1
      %s128 = scalar_select %p125, %s126, %s127
      %p131 = pneg %p125
      %p132 = scmp.eq.s32.totalorder %s25, 1
      %p133 = por %p131, %p132
      %p134 = scmp.ne.s32.totalorder %s126, %s129
      %p135 = scmp.eq.s32.totalorder %s25, 0
      %p136 = por %p134, %p135
      %p137 = scmp.ne.s32.totalorder %s126, %s129
      %p138 = scmp.eq.s32.totalorder %s30, 1
      %p139 = por %p137, %p138
      %p140 = scmp.ne.s32.totalorder %s129, %s130
      %p141 = scmp.eq.s32.totalorder %s30, 0
      %p142 = por %p140, %p141
      %p143 = scmp.ne.s32.totalorder %s129, %s130
      %p144 = scmp.eq.s32.totalorder %s31, 1
      %p145 = por %p143, %p144
      %p147 = scmp.ne.s32.totalorder %s130, %s146
      %p148 = scmp.eq.s32.totalorder %s31, 0
      %p149 = por %p147, %p148
      %s150 = ssub.s32 %s33, %s40
      %s151 = ssub.s32 %s32, %s44
      %s152 = sor.u32 %s150, %s151
      %p153 = scmp.eq.s32.totalorder %s152, 0
      %s155 = sadd.s32 %s154, 1
      %s156 = scalar_select %p153, %s154, %s155
      %p159 = pneg %p153
      %p160 = scmp.eq.s32.totalorder %s25, 1
      %p161 = por %p159, %p160
      %p162 = scmp.ne.s32.totalorder %s154, %s157
      %p163 = scmp.eq.s32.totalorder %s25, 0
      %p164 = por %p162, %p163
      %p165 = scmp.ne.s32.totalorder %s154, %s157
      %p166 = scmp.eq.s32.totalorder %s30, 1
      %p167 = por %p165, %p166
      %p168 = scmp.ne.s32.totalorder %s157, %s158
      %p169 = scmp.eq.s32.totalorder %s30, 0
      %p170 = por %p168, %p169
      %p171 = scmp.ne.s32.totalorder %s157, %s158
      %p172 = scmp.eq.s32.totalorder %s31, 1
      %p173 = por %p171, %p172
      %p175 = scmp.ne.s32.totalorder %s158, %s174
      %p176 = scmp.eq.s32.totalorder %s31, 0
      %p177 = por %p175, %p176
      %s178 = ssub.s32 %s33, %s40
      %s179 = ssub.s32 %s32, %s44
      %s180 = sor.u32 %s178, %s179
      %p181 = scmp.eq.s32.totalorder %s180, 0
      %s183 = sadd.s32 %s182, 1
      %s184 = scalar_select %p181, %s182, %s183
      %p187 = pneg %p181
      %p188 = scmp.eq.s32.totalorder %s25, 1
      %p189 = por %p187, %p188
      %p190 = scmp.ne.s32.totalorder %s182, %s185
      %p191 = scmp.eq.s32.totalorder %s25, 0
      %p192 = por %p190, %p191
      %p193 = scmp.ne.s32.totalorder %s182, %s185
      %p194 = scmp.eq.s32.totalorder %s30, 1
      %p195 = por %p193, %p194
      %p196 = scmp.ne.s32.totalorder %s185, %s186
      %p197 = scmp.eq.s32.totalorder %s30, 0
      %p198 = por %p196, %p197
      %p199 = scmp.ne.s32.totalorder %s185, %s186
      %p200 = scmp.eq.s32.totalorder %s31, 1
      %p201 = por %p199, %p200
      %p203 = scmp.ne.s32.totalorder %s186, %s202
      %p204 = scmp.eq.s32.totalorder %s31, 0
      %p205 = por %p203, %p204
      %p206 = scmp.le.s32.totalorder 1, %s25
      %p207 = scmp.lt.s32.totalorder %s25, 3
      %p208 = pnand %p206, %p207
      %p209 = pneg %p208
      // Predicated region
      $region9: #{tpu_custom_call.1} parent=5 // pred_check
        _
      $region10: #{tpu_custom_call.1} parent=5 // pred_check_branch
        %211 = sbr.rel (%p208) target = $region12
      $region11: #{tpu_custom_call.1} parent=5 // pred_region
        %s212 = ssub.s32 %s25, 1
        // Predicated region
        $region13: #{tpu_custom_call.1} parent=11 // pred_check
          %p213 = pneg %p86
        $region14: #{tpu_custom_call.1} parent=11 // pred_check_branch
          %215 = sbr.rel (%p213) target = $region16
        $region15: #{tpu_custom_call.1} parent=11 // pred_region
          %s217 = ssub.s32 16, 16
          %218 = vsyncadd [#allocation5], %s217
          %s220 = sshll.u32 %s1, 4
          %s221 = int_to_ptr.vmem [resolvable:$true] %s220
          %223 = dma.vmem_to_smem %s221, 16, [#allocation6], [#allocation5]
        $region16: #{tpu_custom_call.1} parent=11 // pred_fallthru
          _
      $region12: #{tpu_custom_call.1} parent=5 // pred_fallthru
        _
      %p224 = scmp.lt.s32.totalorder %s25, 2
      // Predicated region
      $region17: #{tpu_custom_call.1} parent=5 // pred_check
        %p225 = pneg %p224
      $region18: #{tpu_custom_call.1} parent=5 // pred_check_branch
        %227 = sbr.rel (%p225) target = $region20
      $region19: #{tpu_custom_call.1} parent=5 // pred_region
        // Predicated region
        $region21: #{tpu_custom_call.1} parent=19 // pred_check
          %p228 = pneg %p59
        $region22: #{tpu_custom_call.1} parent=19 // pred_check_branch
          %230 = sbr.rel (%p228) target = $region24
        $region23: #{tpu_custom_call.1} parent=19 // pred_region
          %s231 = sand.u32 %s49, 1
          %s232 = scalar_lea.sflag [#allocation3], %s231
          %s233 = sand.u32 %s49, 1
          %s234 = smul.addr %s233, 8
          %s235 = scalar_lea.vmem [#allocation2], %s234
          %s237 = ssub.s32 128, 128
          %238 = vsyncadd %s232, %s237
          %s239 = smul.addr %s33, 4
          %s240 = sadd.s32 %s32, %s239
          %s241 = smul.addr %s240, 32
          %s242 = scalar_lea.hbm %s0, %s241
          %s243 = sshll.u32 %s235, 4
          %s244 = int_to_ptr.vmem [resolvable:$true] %s243
          %249 = dma.hbm_to_vmem [thread:$0]  %s242, 128, %s244, %s232, 32, 32, 2
        $region24: #{tpu_custom_call.1} parent=19 // pred_fallthru
          _
      $region20: #{tpu_custom_call.1} parent=5 // pred_fallthru
        _
      %p250 = scmp.le.s32.totalorder 1, %s25
      %p251 = scmp.lt.s32.totalorder %s25, 3
      %p252 = pnand %p250, %p251
      %p253 = pneg %p252
      // Predicated region
      $region25: #{tpu_custom_call.1} parent=5 // pred_check
        _
      $region26: #{tpu_custom_call.1} parent=5 // pred_check_branch
        %255 = sbr.rel (%p252) target = $region28
      $region27: #{tpu_custom_call.1} parent=5 // pred_region
        %s256 = ssub.s32 %s25, 1
        %s257 = sand.u32 %s52, 1
        %s258 = scalar_lea.sflag [#allocation3], %s257
        %s259 = sand.u32 %s52, 1
        %s260 = smul.addr %s259, 8
        %s261 = scalar_lea.vmem [#allocation2], %s260
        // Predicated region
        $region29: #{tpu_custom_call.1} parent=27 // pred_check
          %p262 = pneg %p65
        $region30: #{tpu_custom_call.1} parent=27 // pred_check_branch
          %264 = sbr.rel (%p262) target = $region32
        $region31: #{tpu_custom_call.1} parent=27 // pred_region
          %265 = dma.done %s258, 128
        $region32: #{tpu_custom_call.1} parent=27 // pred_fallthru
          _
        // Predicated region
        $region33: #{tpu_custom_call.1} parent=27 // pred_check
          %p266 = pneg %p86
        $region34: #{tpu_custom_call.1} parent=27 // pred_check_branch
          %268 = sbr.rel (%p266) target = $region36
        $region35: #{tpu_custom_call.1} parent=27 // pred_region
          %269 = dma.done [#allocation5], 16
        $region36: #{tpu_custom_call.1} parent=27 // pred_fallthru
          _
        %270 = sfence
        %s271 = sand.u32 %s52, 1
        %s272 = scalar_lea.sflag [#allocation3], %s271
        %s273 = sand.u32 %s52, 1
        %s274 = smul.addr %s273, 8
        %s275 = scalar_lea.vmem [#allocation2], %s274
        %p276 = pneg %p65
        %p277 = pneg %p62
        %p278 = pneg %p86
        %p279 = pneg %p83
        %p280 = pneg %p114
        %p281 = pneg %p111
        %s282 = sand.u32 %s101, 1
        %s283 = scalar_lea.sflag [#allocation4], %s282
        %s284 = sand.u32 %s101, 1
        %s285 = smul.addr %s284, 2
        %s286 = scalar_lea.vmem [#allocation7], %s285
        %p287 = pneg %p142
        %p288 = pneg %p139
        %s289 = sand.u32 %s30, 1
        %s290 = scalar_lea.sflag [#allocation9], %s289
        %s291 = sand.u32 %s129, 1
        %s292 = smul.addr %s291, 2
        %s293 = scalar_lea.vmem [#allocation8], %s292
        %p294 = pneg %p170
        %p295 = pneg %p167
        %s296 = sand.u32 %s30, 1
        %s297 = scalar_lea.sflag [#allocation9], %s296
        %s298 = sand.u32 %s157, 1
        %s299 = smul.addr %s298, 2
        %s300 = scalar_lea.vmem [#allocation10], %s299
        %p301 = pneg %p198
        %p302 = pneg %p195
        %s303 = sand.u32 %s185, 1
        %s304 = scalar_lea.sflag [#allocation12], %s303
        %s305 = sand.u32 %s185, 1
        %s306 = smul.addr %s305, 2
        %s307 = scalar_lea.vmem [#allocation11], %s306
        %v308 = vld [vmem:[%s261] sm:$0x3]
        %s309 = scalar_lea.vmem %s261, 2 [#allocation2]
        %v310 = vld [vmem:[%s309] sm:$0x3]
        %s311 = scalar_lea.vmem %s261, 4 [#allocation2]
        %v312 = vld [vmem:[%s311] sm:$0x3]
        %s313 = scalar_lea.vmem %s261, 6 [#allocation2]
        %v314 = vld [vmem:[%s313] sm:$0x3]
        %s315 = sld [smem:[#allocation6]]
        %v316 = vstv %s315
        %v317 = vmul.f32 %v316, %v308
        %s318 = sld [smem:[#allocation6 + $0x4]]
        %v319 = vstv %s318
        %v320 = vmul.f32 %v319, %v310
        %v321 = vadd.f32 %v317, %v320
        %s322 = sld [smem:[#allocation6 + $0x8]]
        %v323 = vstv %s322
        %v324 = vmul.f32 %v323, %v312
        %v325 = vadd.f32 %v321, %v324
        %s326 = sld [smem:[#allocation6 + $0xc]]
        %v327 = vstv %s326
        %v328 = vmul.f32 %v327, %v314
        %v329 = vadd.f32 %v325, %v328
        %s330 = sld [smem:[#allocation6 + $0x10]]
        %v331 = vstv %s330
        %v332 = vadd.f32 %v329, %v331
        %s333 = sld [smem:[#allocation6 + $0x1]]
        %v334 = vstv %s333
        %v335 = vmul.f32 %v334, %v308
        %s336 = sld [smem:[#allocation6 + $0x5]]
        %v337 = vstv %s336
        %v338 = vmul.f32 %v337, %v310
        %v339 = vadd.f32 %v335, %v338
        %s340 = sld [smem:[#allocation6 + $0x9]]
        %v341 = vstv %s340
        %v342 = vmul.f32 %v341, %v312
        %v343 = vadd.f32 %v339, %v342
        %s344 = sld [smem:[#allocation6 + $0xd]]
        %v345 = vstv %s344
        %v346 = vmul.f32 %v345, %v314
        %v347 = vadd.f32 %v343, %v346
        %s348 = sld [smem:[#allocation6 + $0x11]]
        %v349 = vstv %s348
        %v350 = vadd.f32 %v347, %v349
        %s351 = sld [smem:[#allocation6 + $0x2]]
        %v352 = vstv %s351
        %v353 = vmul.f32 %v352, %v308
        %s354 = sld [smem:[#allocation6 + $0x6]]
        %v355 = vstv %s354
        %v356 = vmul.f32 %v355, %v310
        %v357 = vadd.f32 %v353, %v356
        %s358 = sld [smem:[#allocation6 + $0xa]]
        %v359 = vstv %s358
        %v360 = vmul.f32 %v359, %v312
        %v361 = vadd.f32 %v357, %v360
        %s362 = sld [smem:[#allocation6 + $0xe]]
        %v363 = vstv %s362
        %v364 = vmul.f32 %v363, %v314
        %v365 = vadd.f32 %v361, %v364
        %s366 = sld [smem:[#allocation6 + $0x12]]
        %v367 = vstv %s366
        %v368 = vadd.f32 %v365, %v367
        %s369 = sld [smem:[#allocation6 + $0x3]]
        %v370 = vstv %s369
        %v371 = vmul.f32 %v370, %v308
        %s372 = sld [smem:[#allocation6 + $0x7]]
        %v373 = vstv %s372
        %v374 = vmul.f32 %v373, %v310
        %v375 = vadd.f32 %v371, %v374
        %s376 = sld [smem:[#allocation6 + $0xb]]
        %v377 = vstv %s376
        %v378 = vmul.f32 %v377, %v312
        %v379 = vadd.f32 %v375, %v378
        %s380 = sld [smem:[#allocation6 + $0xf]]
        %v381 = vstv %s380
        %v382 = vmul.f32 %v381, %v314
        %v383 = vadd.f32 %v379, %v382
        %s384 = sld [smem:[#allocation6 + $0x13]]
        %v385 = vstv %s384
        %v386 = vadd.f32 %v383, %v385
        %v387 = vmax.f32 %v332, %v350
        %v388 = vmax.f32 %v368, %v386
        %v389 = vmax.f32 %v387, %v388
        %v390 = vsub.f32 %v332, %v389
        %v391 = vmul.f32 %v390, 1.442695
        %v392 = vpow.pop %v391
        %v393 = vsub.f32 %v350, %v389
        %v394 = vmul.f32 %v393, 1.442695
        %v395 = vpow.pop %v394
        %v396 = vsub.f32 %v368, %v389
        %v397 = vmul.f32 %v396, 1.442695
        %v398 = vpow.pop %v397
        %v399 = vsub.f32 %v386, %v389
        %v400 = vmul.f32 %v399, 1.442695
        %v401 = vpow.pop %v400
        %v402 = vadd.f32 %v395, %v398
        %v403 = vadd.f32 %v392, %v395
        %v404 = vadd.f32 %v398, %v401
        %v405 = vadd.f32 %v403, %v404
        %v406 = vrcp.pop %v405
        %v407 = vmul.f32 %v402, %v406
        %s408 = sld [smem:[#allocation6 + $0x14]]
        %v409 = vstv %s408
        %v410 = vmul.f32 %v314, %v409
        %s411 = sld [smem:[#allocation6 + $0x15]]
        %v412 = vstv %s411
        %v413 = vadd.f32 %v410, %v412
        %v414 = vmul.f32 %v413, 0.5
        %v415 = vtanh.pop %v414
        %v416 = vmul.f32 %v415, 0.5
        %v417 = vadd.f32 %v416, 0.5
        %s418 = sld [smem:[#allocation6 + $0x16]]
        %v419 = vstv %s418
        %v420 = vmul.f32 %v308, %v419
        %s421 = sld [smem:[#allocation6 + $0x17]]
        %v422 = vstv %s421
        %v423 = vmul.f32 %v310, %v422
        %v424 = vadd.f32 %v420, %v423
        %s425 = sld [smem:[#allocation6 + $0x18]]
        %v426 = vstv %s425
        %v427 = vmul.f32 %v312, %v426
        %v428 = vadd.f32 %v424, %v427
        %s429 = sld [smem:[#allocation6 + $0x19]]
        %v430 = vstv %s429
        %v431 = vadd.f32 %v428, %v430
        %v432 = vmul.f32 %v431, 0.5
        %v433 = vtanh.pop %v432
        %v434 = vmul.f32 %v433, 0.5
        %v435 = vadd.f32 %v434, 0.5
        %v436 = vadd.f32 %v407, %v417
        %v437 = vadd.f32 %v436, %v435
        %v438 = vmul.f32 %v437, 0.33333334
        %439 = vst [vmem:[%s286] sm:$0x3] %v438
        %440 = vst [vmem:[%s293] sm:$0x3] %v407
        %441 = vst [vmem:[%s300] sm:$0x3] %v417
        %442 = vst [vmem:[%s307] sm:$0x3] %v435
        %s443 = sand.u32 %s101, 1
        %s444 = scalar_lea.sflag [#allocation4], %s443
        %s445 = sand.u32 %s101, 1
        %s446 = smul.addr %s445, 2
        %s447 = scalar_lea.vmem [#allocation7], %s446
        %s448 = sand.u32 %s30, 1
        %s449 = scalar_lea.sflag [#allocation9], %s448
        %s450 = sand.u32 %s129, 1
        %s451 = smul.addr %s450, 2
        %s452 = scalar_lea.vmem [#allocation8], %s451
        %s453 = sand.u32 %s30, 1
        %s454 = scalar_lea.sflag [#allocation9], %s453
        %s455 = sand.u32 %s157, 1
        %s456 = smul.addr %s455, 2
        %s457 = scalar_lea.vmem [#allocation10], %s456
        %s458 = sand.u32 %s185, 1
        %s459 = scalar_lea.sflag [#allocation12], %s458
        %s460 = sand.u32 %s185, 1
        %s461 = smul.addr %s460, 2
        %s462 = scalar_lea.vmem [#allocation11], %s461
        // Predicated region
        $region37: #{tpu_custom_call.1} parent=27 // pred_check
          %p463 = pneg %p111
        $region38: #{tpu_custom_call.1} parent=27 // pred_check_branch
          %465 = sbr.rel (%p463) target = $region40
        $region39: #{tpu_custom_call.1} parent=27 // pred_region
          %s467 = ssub.s32 32, 32
          %468 = vsyncadd %s444, %s467
          %s469 = sadd.s32 %s34, %s35
          %s470 = smul.addr %s469, 32
          %s471 = scalar_lea.hbm %s2, %s470
          %s473 = sshll.u32 %s447, 4
          %s474 = int_to_ptr.vmem [resolvable:$true] %s473
          %476 = dma.vmem_to_hbm [thread:$0]  %s474, 32, %s471, %s444
        $region40: #{tpu_custom_call.1} parent=27 // pred_fallthru
          _
        // Predicated region
        $region41: #{tpu_custom_call.1} parent=27 // pred_check
          %p477 = pneg %p139
        $region42: #{tpu_custom_call.1} parent=27 // pred_check_branch
          %479 = sbr.rel (%p477) target = $region44
        $region43: #{tpu_custom_call.1} parent=27 // pred_region
          %s481 = ssub.s32 32, 32
          %482 = vsyncadd %s449, %s481
          %s483 = sadd.s32 %s34, %s35
          %s484 = smul.addr %s483, 32
          %s485 = scalar_lea.hbm %s3, %s484
          %s487 = sshll.u32 %s452, 4
          %s488 = int_to_ptr.vmem [resolvable:$true] %s487
          %490 = dma.vmem_to_hbm [thread:$0]  %s488, 32, %s485, %s449
        $region44: #{tpu_custom_call.1} parent=27 // pred_fallthru
          _
        // Predicated region
        $region45: #{tpu_custom_call.1} parent=27 // pred_check
          %p491 = pneg %p167
        $region46: #{tpu_custom_call.1} parent=27 // pred_check_branch
          %493 = sbr.rel (%p491) target = $region48
        $region47: #{tpu_custom_call.1} parent=27 // pred_region
          %s495 = ssub.s32 32, 32
          %496 = vsyncadd %s454, %s495
          %s497 = sadd.s32 %s34, %s35
          %s498 = smul.addr %s497, 32
          %s499 = scalar_lea.hbm %s4, %s498
          %s501 = sshll.u32 %s457, 4
          %s502 = int_to_ptr.vmem [resolvable:$true] %s501
          %504 = dma.vmem_to_hbm [thread:$0]  %s502, 32, %s499, %s454
        $region48: #{tpu_custom_call.1} parent=27 // pred_fallthru
          _
        // Predicated region
        $region49: #{tpu_custom_call.1} parent=27 // pred_check
          %p505 = pneg %p195
        $region50: #{tpu_custom_call.1} parent=27 // pred_check_branch
          %507 = sbr.rel (%p505) target = $region52
        $region51: #{tpu_custom_call.1} parent=27 // pred_region
          %s509 = ssub.s32 32, 32
          %510 = vsyncadd %s459, %s509
          %s511 = sadd.s32 %s34, %s35
          %s512 = smul.addr %s511, 32
          %s513 = scalar_lea.hbm %s5, %s512
          %s515 = sshll.u32 %s462, 4
          %s516 = int_to_ptr.vmem [resolvable:$true] %s515
          %518 = dma.vmem_to_hbm [thread:$0]  %s516, 32, %s513, %s459
        $region52: #{tpu_custom_call.1} parent=27 // pred_fallthru
          _
      $region28: #{tpu_custom_call.1} parent=5 // pred_fallthru
        _
      %p519 = scmp.le.s32.totalorder 2, %s25
      // Predicated region
      $region53: #{tpu_custom_call.1} parent=5 // pred_check
        %p520 = pneg %p519
      $region54: #{tpu_custom_call.1} parent=5 // pred_check_branch
        %522 = sbr.rel (%p520) target = $region56
      $region55: #{tpu_custom_call.1} parent=5 // pred_region
        %s523 = ssub.s32 %s25, 2
        // Predicated region
        $region57: #{tpu_custom_call.1} parent=55 // pred_check
          %p524 = pneg %p117
        $region58: #{tpu_custom_call.1} parent=55 // pred_check_branch
          %526 = sbr.rel (%p524) target = $region60
        $region59: #{tpu_custom_call.1} parent=55 // pred_region
          %s527 = sand.u32 %s102, 1
          %s528 = scalar_lea.sflag [#allocation4], %s527
          %s529 = sand.u32 %s102, 1
          %s530 = smul.addr %s529, 2
          %s531 = scalar_lea.vmem [#allocation7], %s530
          %532 = dma.done %s528, 32
        $region60: #{tpu_custom_call.1} parent=55 // pred_fallthru
          _
        // Predicated region
        $region61: #{tpu_custom_call.1} parent=55 // pred_check
          %p533 = pneg %p145
        $region62: #{tpu_custom_call.1} parent=55 // pred_check_branch
          %535 = sbr.rel (%p533) target = $region64
        $region63: #{tpu_custom_call.1} parent=55 // pred_region
          %s536 = sand.u32 %s31, 1
          %s537 = scalar_lea.sflag [#allocation9], %s536
          %s538 = sand.u32 %s130, 1
          %s539 = smul.addr %s538, 2
          %s540 = scalar_lea.vmem [#allocation8], %s539
          %541 = dma.done %s537, 32
        $region64: #{tpu_custom_call.1} parent=55 // pred_fallthru
          _
        // Predicated region
        $region65: #{tpu_custom_call.1} parent=55 // pred_check
          %p542 = pneg %p173
        $region66: #{tpu_custom_call.1} parent=55 // pred_check_branch
          %544 = sbr.rel (%p542) target = $region68
        $region67: #{tpu_custom_call.1} parent=55 // pred_region
          %s545 = sand.u32 %s31, 1
          %s546 = scalar_lea.sflag [#allocation9], %s545
          %s547 = sand.u32 %s158, 1
          %s548 = smul.addr %s547, 2
          %s549 = scalar_lea.vmem [#allocation10], %s548
          %550 = dma.done %s546, 32
        $region68: #{tpu_custom_call.1} parent=55 // pred_fallthru
          _
        // Predicated region
        $region69: #{tpu_custom_call.1} parent=55 // pred_check
          %p551 = pneg %p201
        $region70: #{tpu_custom_call.1} parent=55 // pred_check_branch
          %553 = sbr.rel (%p551) target = $region72
        $region71: #{tpu_custom_call.1} parent=55 // pred_region
          %s554 = sand.u32 %s186, 1
          %s555 = scalar_lea.sflag [#allocation12], %s554
          %s556 = sand.u32 %s186, 1
          %s557 = smul.addr %s556, 2
          %s558 = scalar_lea.vmem [#allocation11], %s557
          %559 = dma.done %s555, 32
        $region72: #{tpu_custom_call.1} parent=55 // pred_fallthru
          _
      $region56: #{tpu_custom_call.1} parent=5 // pred_fallthru
        _
    $region6: #{tpu_custom_call.1} parent=1 // loop_footer
      %s29 = sadd.s32 1, %s25
    $region7: #{tpu_custom_call.1} parent=1 // loop_footer_branch
      %24 = sbr.rel target = $region3
    $region8: #{tpu_custom_call.1} parent=1 // loop_exit
      _
    %560 = vsyncpa [#allocation3], 1
    %s561 = scalar_lea.sflag [#allocation3], 1
    %562 = vsyncpa %s561, 1
    %563 = vsyncpa [#allocation4], 1
    %s564 = scalar_lea.sflag [#allocation4], 1
    %565 = vsyncpa %s564, 1
    %566 = vsyncpa [#allocation9], 1
    %s567 = scalar_lea.sflag [#allocation9], 1
    %568 = vsyncpa %s567, 1
    %569 = vsyncpa [#allocation12], 1
    %s570 = scalar_lea.sflag [#allocation12], 1
    %571 = vsyncpa %s570, 1
    %572 = vsyncpa [#allocation5], 1
    %s573 = scalar_lea.sflag [#allocation5], 1
    %574 = vsyncpa %s573, 1

</llo_original>
